<compile_context>
chip_gen: v6e
topology: v6e:2x2x1
jax: 0.10.0
libtpu: 0.0.40
codegen_flags: <defaults>
</compile_context>

<pallas_src>
import functools
import math

import jax
import jax.numpy as jnp
from jax.experimental import pallas as pl
from jax.experimental.pallas import tpu as pltpu


def _round_up(x, m):
    return (x + m - 1) // m * m


def _ceil_div(x, m):
    return (x + m - 1) // m


def _default_exp_dtype():
    # bf16 transcendentals only pay off (native EUP support) on v6e / v7x.
    try:
        kind = jax.devices()[0].device_kind.lower()
    except Exception:
        return jnp.float32
    if any(tag in kind for tag in ("v6", "v7", "7x")):
        return jnp.bfloat16
    return jnp.float32


def _infonce_kernel(a_ref, p_ref, c_ref,      # row tile, partner tile, col tile
                    out_ref,                  # (1, 8, 128) per-tile partial loss
                    acc_ref,                  # (t, 1) running exp-sum scratch
                    *, inv_temp, batch, bp, n_pad_cols, exp_dtype):
    i = pl.program_id(0)                # row-tile index (parallel)
    j = pl.program_id(1)                # column-tile index (reduction, last)
    nj = pl.num_programs(1)
    t = a_ref.shape[0]
    it = jnp.float32(inv_temp)

    @pl.when(j == 0)
    def _init():
        acc_ref[...] = jnp.zeros_like(acc_ref)

    # (t, t) block of the similarity matrix.  sqrt(1/T) was folded into both
    # (pre-normalized) operands by the wrapper, so s is already cos/T.
    # Contract the last dim of both operands -> no transpose before the MXU.
    s = jax.lax.dot_general(a_ref[...], c_ref[...],
                            (((1,), (1,)), ((), ())),
                            preferred_element_type=jnp.float32)

    # Constant-shift softmax: the diagonal (== 1/T) is the row max, so every
    # exponent is <= ~0.  exp optionally in bf16 (v6e/v7x EUP); f32 accumulate.
    e = jnp.exp((s - it).astype(exp_dtype)).astype(jnp.float32)
    acc_ref[...] += jnp.sum(e, axis=-1, keepdims=True)

    # Self-similarity is excluded from the denominator.  With tq == tk the
    # global diagonal only lives in i == j tiles, so the iota/select work is
    # runtime-gated to ~1/nj of the grid steps.
    @pl.when(i == j)
    def _drop_diag():
        r = jax.lax.broadcasted_iota(jnp.int32, (t, t), 0)
        c = jax.lax.broadcasted_iota(jnp.int32, (t, t), 1)
        acc_ref[...] -= jnp.sum(jnp.where(r == c, e, 0.0),
                                axis=-1, keepdims=True)

    @pl.when(j == nj - 1)
    def _finalize():
        acc = acc_ref[...]
        if n_pad_cols:
            # Zero-padded feature rows give s == 0 exactly, i.e. every padded
            # column contributed exactly exp(-1/T); remove them with a single
            # constant instead of masking every tile.
            acc = acc - jnp.float32(n_pad_cols * math.exp(-inv_temp))
        lse = it + jnp.log(jnp.maximum(acc, jnp.float32(1e-37)))
        # Positive logit: row-wise dot with the partner half (already * 1/T),
        # computed once per row tile in f32.
        pos = jnp.sum(a_ref[...].astype(jnp.float32) *
                      p_ref[...].astype(jnp.float32),
                      axis=-1, keepdims=True)
        row_loss = lse - pos                                        # (t, 1)
        # Mask zero-padded rows (mandatory: their loss is finite garbage).
        g = jax.lax.broadcasted_iota(jnp.int32, (t, 1), 0) + i * t
        valid = (g % bp) < batch
        partial = jnp.sum(jnp.where(valid, row_loss, 0.0))
        # Lane-dense output: one full (8, 128) slab per row tile.
        out_ref[...] = jnp.broadcast_to(partial, out_ref.shape)


def infonce_loss(z1, z2, temperature=0.1, mm_dtype=jnp.bfloat16, exp_dtype=None):
    """Pallas implementation of InfoNCELoss.forward(z1, z2)."""
    assert z1.shape == z2.shape and z1.ndim == 2
    if temperature < 0.03:
        # TODO(synk): add a running-max (flash) logsumexp fallback for very
        # small temperatures; the constant 1/T shift can underflow there.
        raise ValueError("temperature < 0.03 not supported by this kernel")

    b, d = z1.shape
    inv_temp = 1.0 / float(temperature)
    if exp_dtype is None:
        exp_dtype = (jnp.float32
                     if jnp.dtype(mm_dtype) == jnp.dtype(jnp.float32)
                     else _default_exp_dtype())

    dp = _round_up(max(d, 1), 128)        # feature dim -> full 128-lane vregs

    # Square tiles sized to track B (minimal padding) instead of a fixed 256;
    # the cap keeps 3 double-buffered (t, dp) feature tiles well inside VMEM
    # even on v7x (64 MiB physical).
    mm_bytes = jnp.dtype(mm_dtype).itemsize
    cap = 512
    while cap > 128 and 6 * cap * dp * mm_bytes > 36 * 1024 * 1024:
        cap //= 2
    n_half = _ceil_div(b, cap)            # row tiles per half
    t = _round_up(_ceil_div(b, n_half), 16)   # 16: bf16 sublane packing
    bp = n_half * t                       # padded rows per half

    # Pre-normalize once (F.cosine_similarity clamps the norm at 1e-8), fold
    # sqrt(1/T) into the per-row scale so the MXU emits cos/T directly, cast
    # to the matmul dtype, zero-pad and concatenate the two halves.
    sqrt_it = float(inv_temp) ** 0.5

    def _prep(z):
        z = z.astype(jnp.float32)
        sq = jnp.sum(z * z, axis=-1, keepdims=True)
        zn = z * (jax.lax.rsqrt(jnp.maximum(sq, jnp.float32(1e-16))) * sqrt_it)
        return jnp.pad(zn, ((0, bp - b), (0, dp - d))).astype(mm_dtype)

    feats = jnp.concatenate([_prep(z1), _prep(z2)], axis=0)   # (2*bp, dp)

    n_rows = 2 * n_half                   # row tiles (>= 2 -> both v7x TCs)
    n_cols = 2 * n_half                   # column tiles (reduction axis, last)

    kernel = functools.partial(
        _infonce_kernel,
        inv_temp=inv_temp,
        batch=b,
        bp=bp,
        n_pad_cols=2 * (bp - b),
        exp_dtype=exp_dtype,
    )

    grid_spec = pltpu.PrefetchScalarGridSpec(
        num_scalar_prefetch=0,
        grid=(n_rows, n_cols),
        in_specs=[
            # Row tile of features (resident across the whole j sweep).
            pl.BlockSpec((t, dp), lambda i, j: (i, 0)),
            # Partner rows (other half) for the positive logit.
            pl.BlockSpec((t, dp), lambda i, j: ((i + n_half) % n_rows, 0)),
            # Column tile streamed over the reduction axis.
            pl.BlockSpec((t, dp), lambda i, j: (j, 0)),
        ],
        out_specs=pl.BlockSpec((1, 8, 128), lambda i, j: (i, 0, 0)),
        scratch_shapes=[pltpu.VMEM((t, 1), jnp.float32)],
    )

    partials = pl.pallas_call(
        kernel,
        out_shape=jax.ShapeDtypeStruct((n_rows, 8, 128), jnp.float32),
        grid_spec=grid_spec,
        compiler_params=pltpu.CompilerParams(
            dimension_semantics=("parallel", "arbitrary"),
            vmem_limit_bytes=48 * 1024 * 1024),   # headroom; < v7x physical
    )(feats, feats, feats)

    # Sum of per-row losses over the 2B real rows (padded rows already masked
    # in-kernel), averaged like F.cross_entropy(reduction='mean').
    return jnp.sum(partials[:, 0, 0]) / (2.0 * b)


def _infonce_ref(z1, z2, temperature=0.1):
    """Pure-JAX reference mirroring the PyTorch module (full f32)."""
    b = z1.shape[0]
    f = jnp.concatenate([z1, z2], axis=0).astype(jnp.float32)
    n = 2 * b
    fn = f / jnp.maximum(jnp.linalg.norm(f, axis=-1, keepdims=True), 1e-8)
    sim = jnp.matmul(fn, fn.T, precision=jax.lax.Precision.HIGHEST) / temperature
    row = jnp.arange(n)[:, None]
    col = jnp.arange(n)[None, :]
    diag = row == col
    pos_mask = col == ((row + b) % n)
    sim_nodiag = jnp.where(diag, -jnp.inf, sim)
    lse = jax.scipy.special.logsumexp(sim_nodiag, axis=-1)
    pos = jnp.sum(jnp.where(pos_mask, sim, 0.0), axis=-1)
    return jnp.mean(lse - pos)


if __name__ == "__main__":
    key = jax.random.PRNGKey(0)
    k1, k2, k3, k4, k5, k6 = jax.random.split(key, 6)

    # Small case (exercises feature-dim and batch padding): B=4, D=32.
    z1 = jax.random.normal(k1, (4, 32), dtype=jnp.float32)
    z2 = jax.random.normal(k2, (4, 32), dtype=jnp.float32)
    ref = _infonce_ref(z1, z2, temperature=0.1)

    loss_f32 = jax.block_until_ready(
        infonce_loss(z1, z2, temperature=0.1, mm_dtype=jnp.float32))
    assert jnp.allclose(loss_f32, ref, atol=2e-2, rtol=2e-2), (loss_f32, ref)

    # Default fast path: bf16 MXU feed (f32 accumulation) -> looser tolerance.
    loss_fast = jax.block_until_ready(infonce_loss(z1, z2, temperature=0.1))
    assert jnp.allclose(loss_fast, ref, atol=5e-2, rtol=5e-2), (loss_fast, ref)

    # Multi-tile case with no padding: B=320, D=64 -> 320-row tiles, 2x2 grid.
    z1b = jax.random.normal(k3, (320, 64), dtype=jnp.float32)
    z2b = jax.random.normal(k4, (320, 64), dtype=jnp.float32)
    refb = _infonce_ref(z1b, z2b, temperature=0.1)
    lossb = jax.block_until_ready(infonce_loss(z1b, z2b, temperature=0.1))
    assert jnp.allclose(lossb, refb, atol=5e-2, rtol=2e-2), (lossb, refb)

    # Two row tiles per half with batch + feature padding: B=600, D=96 ->
    # 304-row tiles, padded halves of 608, a 4x4 grid, wrapping partner map.
    z1c = jax.random.normal(k5, (600, 96), dtype=jnp.float32)
    z2c = jax.random.normal(k6, (600, 96), dtype=jnp.float32)
    refc = _infonce_ref(z1c, z2c, temperature=0.1)
    lossc = jax.block_until_ready(infonce_loss(z1c, z2c, temperature=0.1))
    assert jnp.allclose(lossc, refc, atol=5e-2, rtol=2e-2), (lossc, refc)

    print("KERNEL_OK")
</pallas_src>

<mosaic_0001>
module attributes {stable_mosaic.version = 11 : i64} {
  func.func @_infonce_kernel(%arg0: i32, %arg1: i32, %arg2: memref<16x128xf32, #tpu.memory_space<vmem>>, %arg3: memref<16x128xf32, #tpu.memory_space<vmem>>, %arg4: memref<16x128xf32, #tpu.memory_space<vmem>>, %arg5: memref<1x8x128xf32, #tpu.memory_space<vmem>>, %arg6: memref<16x1xf32, #tpu.memory_space<vmem>>) attributes {dimension_semantics = [#tpu.dimension_semantics<parallel>, #tpu.dimension_semantics<arbitrary>], iteration_bounds = array<i64: 2, 2>, scalar_prefetch = 0 : i64, scratch_operands = 1 : i64, tpu.core_type = #tpu.core_type<tc>, window_params = [{transform_indices = @transform_0, window_bounds = array<i64: 16, 128>}, {transform_indices = @transform_1, window_bounds = array<i64: 16, 128>}, {transform_indices = @transform_2, window_bounds = array<i64: 16, 128>}, {transform_indices = @transform_3, window_bounds = array<i64: 1, 8, 128>}]} {
    %c0_i32 = arith.constant 0 : i32
    %0 = arith.cmpi eq, %arg1, %c0_i32 : i32
    %1 = arith.extui %0 : i1 to i32
    %c0_i32_0 = arith.constant 0 : i32
    %2 = arith.cmpi ne, %1, %c0_i32_0 : i32
    scf.if %2 {
      %cst_13 = arith.constant 0.000000e+00 : f32
      %20 = vector.broadcast %cst_13 : f32 to vector<16x1xf32>
      %c0_14 = arith.constant 0 : index
      %c0_15 = arith.constant 0 : index
      %21 = vector.load %arg6[%c0_14, %c0_15] : memref<16x1xf32, #tpu.memory_space<vmem>>, vector<16x1xf32>
      tpu.vector_store %arg6[%c0_14, %c0_15], %20 {strides = array<i32>} : memref<16x1xf32, #tpu.memory_space<vmem>>, vector<16x1xf32>,
    } else {
    }
    %c0 = arith.constant 0 : index
    %c0_1 = arith.constant 0 : index
    %3 = vector.load %arg2[%c0, %c0_1] : memref<16x128xf32, #tpu.memory_space<vmem>>, vector<16x128xf32>
    %c0_2 = arith.constant 0 : index
    %c0_3 = arith.constant 0 : index
    %4 = vector.load %arg4[%c0_2, %c0_3] : memref<16x128xf32, #tpu.memory_space<vmem>>, vector<16x128xf32>
    %cst = arith.constant dense<0.000000e+00> : vector<16x16xf32>
    %5 = tpu.matmul %3, %4, %cst {dimension_numbers = #tpu.dot_dimension_numbers<[1], [1], [0], [0], [0, 0, 1, 0], [], []>} : vector<16x128xf32>, vector<16x128xf32>, vector<16x16xf32> -> vector<16x16xf32>
    %cst_4 = arith.constant 1.000000e+01 : f32
    %6 = vector.broadcast %cst_4 : f32 to vector<16x16xf32>
    %7 = arith.subf %5, %6 : vector<16x16xf32>
    %8 = math.exp %7 : vector<16x16xf32>
    %c0_5 = arith.constant 0 : index
    %c0_6 = arith.constant 0 : index
    %9 = vector.load %arg6[%c0_5, %c0_6] : memref<16x1xf32, #tpu.memory_space<vmem>>, vector<16x1xf32>
    %cst_7 = arith.constant dense<0.000000e+00> : vector<16xf32>
    %10 = vector.multi_reduction <add>, %8, %cst_7 [1] : vector<16x16xf32> to vector<16xf32>
    %11 = vector.shape_cast %10 : vector<16xf32> to vector<16x1xf32>
    %12 = arith.addf %9, %11 : vector<16x1xf32>
    %c0_8 = arith.constant 0 : index
    %c0_9 = arith.constant 0 : index
    %13 = vector.load %arg6[%c0_8, %c0_9] : memref<16x1xf32, #tpu.memory_space<vmem>>, vector<16x1xf32>
    tpu.vector_store %arg6[%c0_8, %c0_9], %12 {strides = array<i32>} : memref<16x1xf32, #tpu.memory_space<vmem>>, vector<16x1xf32>,
    %14 = arith.cmpi eq, %arg0, %arg1 : i32
    %15 = arith.extui %14 : i1 to i32
    %c0_i32_10 = arith.constant 0 : i32
    %16 = arith.cmpi ne, %15, %c0_i32_10 : i32
    scf.if %16 {
      %20 = tpu.iota {dimensions = array<i32: 0>} : vector<16x16xi32>
      %21 = tpu.iota {dimensions = array<i32: 1>} : vector<16x16xi32>
      %c0_13 = arith.constant 0 : index
      %c0_14 = arith.constant 0 : index
      %22 = vector.load %arg6[%c0_13, %c0_14] : memref<16x1xf32, #tpu.memory_space<vmem>>, vector<16x1xf32>
      %23 = arith.cmpi eq, %20, %21 : vector<16x16xi32>
      %cst_15 = arith.constant 0.000000e+00 : f32
      %24 = vector.broadcast %cst_15 : f32 to vector<16x16xf32>
      %25 = arith.select %23, %8, %24 : vector<16x16xi1>, vector<16x16xf32>
      %cst_16 = arith.constant dense<0.000000e+00> : vector<16xf32>
      %26 = vector.multi_reduction <add>, %25, %cst_16 [1] : vector<16x16xf32> to vector<16xf32>
      %27 = vector.shape_cast %26 : vector<16xf32> to vector<16x1xf32>
      %28 = arith.subf %22, %27 : vector<16x1xf32>
      %c0_17 = arith.constant 0 : index
      %c0_18 = arith.constant 0 : index
      %29 = vector.load %arg6[%c0_17, %c0_18] : memref<16x1xf32, #tpu.memory_space<vmem>>, vector<16x1xf32>
      tpu.vector_store %arg6[%c0_17, %c0_18], %28 {strides = array<i32>} : memref<16x1xf32, #tpu.memory_space<vmem>>, vector<16x1xf32>,
    } else {
    }
    %c1_i32 = arith.constant 1 : i32
    %17 = arith.cmpi eq, %arg1, %c1_i32 : i32
    %18 = arith.extui %17 : i1 to i32
    %cst_11 = arith.constant 1.000000e+01 : f32
    %c0_i32_12 = arith.constant 0 : i32
    %19 = arith.cmpi ne, %18, %c0_i32_12 : i32
    scf.if %19 {
      %c0_13 = arith.constant 0 : index
      %c0_14 = arith.constant 0 : index
      %20 = vector.load %arg6[%c0_13, %c0_14] : memref<16x1xf32, #tpu.memory_space<vmem>>, vector<16x1xf32>
      %cst_15 = arith.constant 0.00108959829 : f32
      %21 = vector.broadcast %cst_15 : f32 to vector<16x1xf32>
      %22 = arith.subf %20, %21 : vector<16x1xf32>
      %cst_16 = arith.constant 9.99999991E-38 : f32
      %23 = vector.broadcast %cst_16 : f32 to vector<16x1xf32>
      %24 = arith.maximumf %22, %23 : vector<16x1xf32>
      %25 = math.log %24 : vector<16x1xf32>
      %26 = vector.broadcast %cst_11 : f32 to vector<16x1xf32>
      %27 = arith.addf %26, %25 : vector<16x1xf32>
      %c0_17 = arith.constant 0 : index
      %c0_18 = arith.constant 0 : index
      %28 = vector.load %arg2[%c0_17, %c0_18] : memref<16x128xf32, #tpu.memory_space<vmem>>, vector<16x128xf32>
      %c0_19 = arith.constant 0 : index
      %c0_20 = arith.constant 0 : index
      %29 = vector.load %arg3[%c0_19, %c0_20] : memref<16x128xf32, #tpu.memory_space<vmem>>, vector<16x128xf32>
      %30 = arith.mulf %28, %29 : vector<16x128xf32>
      %cst_21 = arith.constant dense<0.000000e+00> : vector<16xf32>
      %31 = vector.multi_reduction <add>, %30, %cst_21 [1] : vector<16x128xf32> to vector<16xf32>
      %32 = vector.shape_cast %31 : vector<16xf32> to vector<16x1xf32>
      %33 = arith.subf %27, %32 : vector<16x1xf32>
      %34 = tpu.iota {dimensions = array<i32: 0>} : vector<16x1xi32>
      %c16_i32 = arith.constant 16 : i32
      %35 = arith.muli %arg0, %c16_i32 : i32
      %36 = vector.broadcast %35 : i32 to vector<16x1xi32>
      %37 = arith.addi %34, %36 : vector<16x1xi32>
      %c16_i32_22 = arith.constant 16 : i32
      %c0_i32_23 = arith.constant 0 : i32
      %38 = arith.cmpi eq, %c16_i32_22, %c0_i32_23 : i32
      %c1_i32_24 = arith.constant 1 : i32
      %39 = arith.select %38, %c1_i32_24, %c16_i32_22 : i32
      %40 = vector.broadcast %39 : i32 to vector<16x1xi32>
      %41 = arith.remsi %37, %40 : vector<16x1xi32>
      %c0_i32_25 = arith.constant 0 : i32
      %42 = vector.broadcast %c0_i32_25 : i32 to vector<16x1xi32>
      %43 = arith.cmpi ne, %41, %42 : vector<16x1xi32>
      %c0_i32_26 = arith.constant 0 : i32
      %44 = vector.broadcast %c0_i32_26 : i32 to vector<16x1xi32>
      %45 = arith.cmpi slt, %41, %44 : vector<16x1xi32>
      %c0_i32_27 = arith.constant 0 : i32
      %46 = arith.cmpi slt, %39, %c0_i32_27 : i32
      %47 = vector.broadcast %46 : i1 to vector<16x1xi1>
      %48 = vector.broadcast %47 : vector<16x1xi1> to vector<16x1xi1>
      %49 = arith.xori %45, %48 : vector<16x1xi1>
      %50 = arith.andi %49, %43 : vector<16x1xi1>
      %51 = vector.broadcast %39 : i32 to vector<16x1xi32>
      %52 = arith.addi %41, %51 : vector<16x1xi32>
      %53 = arith.select %50, %52, %41 : vector<16x1xi1>, vector<16x1xi32>
      %c4_i32 = arith.constant 4 : i32
      %54 = vector.broadcast %c4_i32 : i32 to vector<16x1xi32>
      %55 = arith.cmpi slt, %53, %54 : vector<16x1xi32>
      %cst_28 = arith.constant 0.000000e+00 : f32
      %56 = vector.broadcast %cst_28 : f32 to vector<16x1xf32>
      %57 = arith.select %55, %33, %56 : vector<16x1xi1>, vector<16x1xf32>
      %58 = vector.shape_cast %57 : vector<16x1xf32> to vector<1x16x1xf32>
      %cst_29 = arith.constant dense<0.000000e+00> : vector<1xf32>
      %59 = vector.multi_reduction <add>, %58, %cst_29 [1, 2] : vector<1x16x1xf32> to vector<1xf32>
      %60 = vector.shape_cast %59 : vector<1xf32> to vector<1x1x1xf32>
      %61 = vector.extract %60[0, 0, 0] : f32 from vector<1x1x1xf32>
      %62 = vector.broadcast %61 : f32 to vector<1x8x128xf32>
      %c0_30 = arith.constant 0 : index
      %c0_31 = arith.constant 0 : index
      %c0_32 = arith.constant 0 : index
      %63 = vector.load %arg5[%c0_30, %c0_31, %c0_32] : memref<1x8x128xf32, #tpu.memory_space<vmem>>, vector<1x8x128xf32>
      tpu.vector_store %arg5[%c0_30, %c0_31, %c0_32], %62 {strides = array<i32>} : memref<1x8x128xf32, #tpu.memory_space<vmem>>, vector<1x8x128xf32>,
    } else {
    }
    return
  }
  func.func @transform_0(%arg0: i32, %arg1: i32) -> (i32, i32) {
    %c0_i32 = arith.constant 0 : i32
    %c0_i32_0 = arith.constant 0 : i32
    return %arg0, %c0_i32 : i32, i32
  }
  func.func @transform_1(%arg0: i32, %arg1: i32) -> (i32, i32) {
    %c1_i32 = arith.constant 1 : i32
    %0 = arith.addi %arg0, %c1_i32 : i32
    %c2_i32 = arith.constant 2 : i32
    %c0_i32 = arith.constant 0 : i32
    %1 = arith.cmpi eq, %c2_i32, %c0_i32 : i32
    %c1_i32_0 = arith.constant 1 : i32
    %2 = arith.select %1, %c1_i32_0, %c2_i32 : i32
    %3 = arith.remsi %0, %2 : i32
    %c0_i32_1 = arith.constant 0 : i32
    %4 = arith.cmpi ne, %3, %c0_i32_1 : i32
    %c0_i32_2 = arith.constant 0 : i32
    %5 = arith.cmpi slt, %3, %c0_i32_2 : i32
    %c0_i32_3 = arith.constant 0 : i32
    %6 = arith.cmpi slt, %2, %c0_i32_3 : i32
    %7 = arith.xori %5, %6 : i1
    %8 = arith.andi %7, %4 : i1
    %9 = arith.addi %3, %2 : i32
    %10 = arith.select %8, %9, %3 : i32
    %c0_i32_4 = arith.constant 0 : i32
    %c0_i32_5 = arith.constant 0 : i32
    return %10, %c0_i32_4 : i32, i32
  }
  func.func @transform_2(%arg0: i32, %arg1: i32) -> (i32, i32) {
    %c0_i32 = arith.constant 0 : i32
    %c0_i32_0 = arith.constant 0 : i32
    return %arg1, %c0_i32 : i32, i32
  }
  func.func @transform_3(%arg0: i32, %arg1: i32) -> (i32, i32, i32) {
    %c0_i32 = arith.constant 0 : i32
    %c0_i32_0 = arith.constant 0 : i32
    %c0_i32_1 = arith.constant 0 : i32
    return %arg0, %c0_i32, %c0_i32_0 : i32, i32, i32
  }
}

</mosaic_0001>

<llo_original>
// kernel: tpu_custom_call.1
$region0: #{tpu_custom_call.1}
  #allocation0 [shape = 'u32[]', space=smem, size = 0x4, offset = 0x4, fixed_abs, tag = 'smem constant byte address 0x4 - core index']
  #allocation1 [shape = 'u32[144,128]{1,0:T(1,128)}', space=vmem, size = 0x12000, scoped, tag = 'internal scratch']
  #allocation2 [shape = 'f32[16,1]{1,0:T(8,128)}', space=vmem, size = 0x2000, scoped, tag = 'scratch operand']
  %s0 = inlined_call_operand.hbm [shape: f32[32,128], index: 0, kind: input, shape index: {}]
  %s1 = inlined_call_operand.hbm [shape: f32[32,128], index: 1, kind: input, shape index: {}]
  %s2 = inlined_call_operand.hbm [shape: f32[32,128], index: 2, kind: input, shape index: {}]
  %s3 = inlined_call_operand.hbm [shape: f32[2,8,128], index: 3, kind: output, shape index: {}]
  %s4 = sld [smem:[#allocation0]]
  $region69: #{tpu_custom_call.1} parent=0
    _
  %s6 = ssub.s32 1, %s4
  %s7 = scalar_select 0, %s6, %s4
  $region1: #{tpu_custom_call.1} parent=0
    #allocation3 [shape = 'u8[16384]{0}', space=vmem, size = 0x4000, scoped, tag = 'input window, operand 0']
    #allocation4 [shape = 's32[2]{0}', space=sflag, size = 0x8, scoped, tag = 'scoped memory for tpu_custom_call.1']
    #allocation5 [shape = 's32[2]{0}', space=sflag, size = 0x8, scoped, tag = 'scoped memory for tpu_custom_call.1']
    #allocation6 [shape = 'u8[16384]{0}', space=vmem, size = 0x4000, scoped, tag = 'input window, operand 1']
    #allocation7 [shape = 's32[2]{0}', space=sflag, size = 0x8, scoped, tag = 'scoped memory for tpu_custom_call.1']
    #allocation8 [shape = 'u8[16384]{0}', space=vmem, size = 0x4000, scoped, tag = 'input window, operand 2']
    #allocation9 [shape = 'u8[8192]{0}', space=vmem, size = 0x2000, scoped, tag = 'output window, operand 0']
    %8 = vsyncpa [#allocation4], 0
    %s9 = scalar_lea.sflag [#allocation4], 1
    %10 = vsyncpa %s9, 0
    %11 = vsyncpa [#allocation7], 0
    %s12 = scalar_lea.sflag [#allocation7], 1
    %13 = vsyncpa %s12, 0
    %14 = vsyncpa [#allocation5], 0
    %s15 = scalar_lea.sflag [#allocation5], 1
    %16 = vsyncpa %s15, 0
    loop: start=0, step=1, limit=6
    $region2: #{tpu_custom_call.1} parent=1 // loop_pre_header
      _
    $region3: #{tpu_custom_call.1} parent=1 // loop_header
      %s18 = sphi 0, %s22
      %p19 = scmp.ge.s32.totalorder %s18, 6
      %s25 = sphi 0, %s37
      %s26 = sphi 0, %s33
      %s27 = sphi 0, %s25
      %s28 = sphi 0, %s26
      %s29 = sphi 0, %s27
      %s30 = sphi 0, %s28
      %s40 = sphi 0, %s42
      %s43 = sphi 0, %s40
      %s44 = sphi 0, %s43
      %s60 = sphi 0, %s44
      %s92 = sphi 0, %s94
      %s95 = sphi 0, %s92
      %s96 = sphi 0, %s95
      %s112 = sphi 0, %s96
      %s118 = sphi 0, %s120
      %s121 = sphi 0, %s118
      %s122 = sphi 0, %s121
      %s138 = sphi 0, %s122
      %s144 = sphi 0, %s146
      %s147 = sphi 0, %s144
      %s148 = sphi 0, %s147
      %s164 = sphi 0, %s148
    $region4: #{tpu_custom_call.1} parent=1 // loop_header_branch
      %21 = sbr.rel (%p19) target = $region8
    $region5: #{tpu_custom_call.1} parent=1 // loop_body
      %s23 = ssub.s32 %s18, 1
      %s24 = ssub.s32 %s18, 2
      %s31 = sadd.s32 1, %s26
      %p32 = scmp.ge.s32.totalorder %s31, 2
      %s33 = scalar_select %p32, 0, %s31
      %s34 = sadd.s32 1, %s25
      %s35 = scalar_select %p32, %s34, %s25
      %p36 = scmp.ge.s32.totalorder %s35, 2
      %s37 = scalar_select %p36, 0, %s35
      %s38 = ssub.s32 %s25, %s37
      %p39 = scmp.eq.s32.totalorder %s38, 0
      %s41 = sadd.s32 %s40, 1
      %s42 = scalar_select %p39, %s40, %s41
      %p45 = pneg %p39
      %p46 = scmp.eq.s32.totalorder %s18, 3
      %p47 = por %p45, %p46
      %p48 = scmp.ne.s32.totalorder %s40, %s43
      %p49 = scmp.eq.s32.totalorder %s18, 0
      %p50 = por %p48, %p49
      %p51 = scmp.ne.s32.totalorder %s40, %s43
      %p52 = scmp.eq.s32.totalorder %s23, 3
      %p53 = por %p51, %p52
      %p54 = scmp.ne.s32.totalorder %s43, %s44
      %p55 = scmp.eq.s32.totalorder %s23, 0
      %p56 = por %p54, %p55
      %p57 = scmp.ne.s32.totalorder %s43, %s44
      %p58 = scmp.eq.s32.totalorder %s24, 3
      %p59 = por %p57, %p58
      %p61 = scmp.ne.s32.totalorder %s44, %s60
      %p62 = scmp.eq.s32.totalorder %s24, 0
      %p63 = por %p61, %p62
      %s64 = sadd.s32 %s25, 1
      %p65 = scmp.lt.s32.totalorder %s64, 0
      %s66 = ssub.s32 0, %s64
      %s67 = scalar_select %p65, %s66, %s64
      %s68 = sand.u32 %s67, 1
      %s69 = ssub.s32 0, %s68
      %s70 = scalar_select %p65, %s69, %s68
      %p71 = scmp.ne.s32.totalorder %s70, 0
      %p72 = scmp.lt.s32.totalorder %s70, 0
      %p73 = pnand %p72, %p71
      %p74 = pneg %p73
      %s75 = sadd.s32 %s70, 2
      %s76 = scalar_select %p74, %s75, %s70
      %s77 = sadd.s32 %s37, 1
      %p78 = scmp.lt.s32.totalorder %s77, 0
      %s79 = ssub.s32 0, %s77
      %s80 = scalar_select %p78, %s79, %s77
      %s81 = sand.u32 %s80, 1
      %s82 = ssub.s32 0, %s81
      %s83 = scalar_select %p78, %s82, %s81
      %p84 = scmp.ne.s32.totalorder %s83, 0
      %p85 = scmp.lt.s32.totalorder %s83, 0
      %p86 = pnand %p85, %p84
      %p87 = pneg %p86
      %s88 = sadd.s32 %s83, 2
      %s89 = scalar_select %p87, %s88, %s83
      %s90 = ssub.s32 %s76, %s89
      %p91 = scmp.eq.s32.totalorder %s90, 0
      %s93 = sadd.s32 %s92, 1
      %s94 = scalar_select %p91, %s92, %s93
      %p97 = pneg %p91
      %p98 = scmp.eq.s32.totalorder %s18, 3
      %p99 = por %p97, %p98
      %p100 = scmp.ne.s32.totalorder %s92, %s95
      %p101 = scmp.eq.s32.totalorder %s18, 0
      %p102 = por %p100, %p101
      %p103 = scmp.ne.s32.totalorder %s92, %s95
      %p104 = scmp.eq.s32.totalorder %s23, 3
      %p105 = por %p103, %p104
      %p106 = scmp.ne.s32.totalorder %s95, %s96
      %p107 = scmp.eq.s32.totalorder %s23, 0
      %p108 = por %p106, %p107
      %p109 = scmp.ne.s32.totalorder %s95, %s96
      %p110 = scmp.eq.s32.totalorder %s24, 3
      %p111 = por %p109, %p110
      %p113 = scmp.ne.s32.totalorder %s96, %s112
      %p114 = scmp.eq.s32.totalorder %s24, 0
      %p115 = por %p113, %p114
      %s116 = ssub.s32 %s26, %s33
      %p117 = scmp.eq.s32.totalorder %s116, 0
      %s119 = sadd.s32 %s118, 1
      %s120 = scalar_select %p117, %s118, %s119
      %p123 = pneg %p117
      %p124 = scmp.eq.s32.totalorder %s18, 3
      %p125 = por %p123, %p124
      %p126 = scmp.ne.s32.totalorder %s118, %s121
      %p127 = scmp.eq.s32.totalorder %s18, 0
      %p128 = por %p126, %p127
      %p129 = scmp.ne.s32.totalorder %s118, %s121
      %p130 = scmp.eq.s32.totalorder %s23, 3
      %p131 = por %p129, %p130
      %p132 = scmp.ne.s32.totalorder %s121, %s122
      %p133 = scmp.eq.s32.totalorder %s23, 0
      %p134 = por %p132, %p133
      %p135 = scmp.ne.s32.totalorder %s121, %s122
      %p136 = scmp.eq.s32.totalorder %s24, 3
      %p137 = por %p135, %p136
      %p139 = scmp.ne.s32.totalorder %s122, %s138
      %p140 = scmp.eq.s32.totalorder %s24, 0
      %p141 = por %p139, %p140
      %s142 = ssub.s32 %s25, %s37
      %p143 = scmp.eq.s32.totalorder %s142, 0
      %s145 = sadd.s32 %s144, 1
      %s146 = scalar_select %p143, %s144, %s145
      %p149 = pneg %p143
      %p150 = scmp.eq.s32.totalorder %s18, 3
      %p151 = por %p149, %p150
      %p152 = scmp.ne.s32.totalorder %s144, %s147
      %p153 = scmp.eq.s32.totalorder %s18, 0
      %p154 = por %p152, %p153
      %p155 = scmp.ne.s32.totalorder %s144, %s147
      %p156 = scmp.eq.s32.totalorder %s23, 3
      %p157 = por %p155, %p156
      %p158 = scmp.ne.s32.totalorder %s147, %s148
      %p159 = scmp.eq.s32.totalorder %s23, 0
      %p160 = por %p158, %p159
      %p161 = scmp.ne.s32.totalorder %s147, %s148
      %p162 = scmp.eq.s32.totalorder %s24, 3
      %p163 = por %p161, %p162
      %p165 = scmp.ne.s32.totalorder %s148, %s164
      %p166 = scmp.eq.s32.totalorder %s24, 0
      %p167 = por %p165, %p166
      %p168 = scmp.le.s32.totalorder 1, %s18
      %p169 = scmp.lt.s32.totalorder %s18, 5
      %p170 = pnand %p168, %p169
      %p171 = pneg %p170
      // Predicated region
      $region9: #{tpu_custom_call.1} parent=5 // pred_check
        _
      $region10: #{tpu_custom_call.1} parent=5 // pred_check_branch
        %173 = sbr.rel (%p170) target = $region12
      $region11: #{tpu_custom_call.1} parent=5 // pred_region
        %s174 = ssub.s32 %s18, 1
      $region12: #{tpu_custom_call.1} parent=5 // pred_fallthru
        _
      %p175 = scmp.lt.s32.totalorder %s18, 4
      // Predicated region
      $region13: #{tpu_custom_call.1} parent=5 // pred_check
        %p176 = pneg %p175
      $region14: #{tpu_custom_call.1} parent=5 // pred_check_branch
        %178 = sbr.rel (%p176) target = $region16
      $region15: #{tpu_custom_call.1} parent=5 // pred_region
        // Predicated region
        $region17: #{tpu_custom_call.1} parent=15 // pred_check
          %p179 = pneg %p50
        $region18: #{tpu_custom_call.1} parent=15 // pred_check_branch
          %181 = sbr.rel (%p179) target = $region20
        $region19: #{tpu_custom_call.1} parent=15 // pred_region
          %s182 = sand.u32 %s40, 1
          %s183 = scalar_lea.sflag [#allocation4], %s182
          %s184 = sand.u32 %s40, 1
          %s185 = smul.addr %s184, 16
          %s186 = scalar_lea.vmem [#allocation3], %s185
          %s187 = smul.u32 2, %s25
          %s189 = ssub.s32 256, 256
          %190 = vsyncadd %s183, %s189
          %s191 = smul.addr %s187, 128
          %s192 = scalar_lea.hbm %s0, %s191
          %s193 = sshll.u32 %s186, 4
          %s194 = int_to_ptr.vmem [resolvable:$true] %s193
          %199 = dma.hbm_to_vmem [thread:$0]  %s192, 256, %s194, %s183, 128, 128, 8
        $region20: #{tpu_custom_call.1} parent=15 // pred_fallthru
          _
        // Predicated region
        $region21: #{tpu_custom_call.1} parent=15 // pred_check
          %p200 = pneg %p102
        $region22: #{tpu_custom_call.1} parent=15 // pred_check_branch
          %202 = sbr.rel (%p200) target = $region24
        $region23: #{tpu_custom_call.1} parent=15 // pred_region
          %s203 = sand.u32 %s18, 1
          %s204 = scalar_lea.sflag [#allocation7], %s203
          %s205 = sand.u32 %s92, 1
          %s206 = smul.addr %s205, 16
          %s207 = scalar_lea.vmem [#allocation6], %s206
          %s208 = sadd.s32 %s25, 1
          %p209 = scmp.lt.s32.totalorder %s208, 0
          %s210 = ssub.s32 0, %s208
          %s211 = scalar_select %p209, %s210, %s208
          %s212 = sand.u32 %s211, 1
          %s213 = ssub.s32 0, %s212
          %s214 = scalar_select %p209, %s213, %s212
          %p215 = scmp.ne.s32.totalorder %s214, 0
          %p216 = scmp.lt.s32.totalorder %s214, 0
          %p217 = pnand %p216, %p215
          %p218 = pneg %p217
          %s219 = sadd.s32 %s214, 2
          %s220 = scalar_select %p218, %s219, %s214
          %s221 = smul.u32 2, %s220
          %s223 = ssub.s32 256, 256
          %224 = vsyncadd %s204, %s223
          %s225 = smul.addr %s221, 128
          %s226 = scalar_lea.hbm %s1, %s225
          %s227 = sshll.u32 %s207, 4
          %s228 = int_to_ptr.vmem [resolvable:$true] %s227
          %233 = dma.hbm_to_vmem [thread:$0]  %s226, 256, %s228, %s204, 128, 128, 8
        $region24: #{tpu_custom_call.1} parent=15 // pred_fallthru
          _
        // Predicated region
        $region25: #{tpu_custom_call.1} parent=15 // pred_check
          %p234 = pneg %p128
        $region26: #{tpu_custom_call.1} parent=15 // pred_check_branch
          %236 = sbr.rel (%p234) target = $region28
        $region27: #{tpu_custom_call.1} parent=15 // pred_region
          %s237 = sand.u32 %s18, 1
          %s238 = scalar_lea.sflag [#allocation7], %s237
          %s239 = sand.u32 %s118, 1
          %s240 = smul.addr %s239, 16
          %s241 = scalar_lea.vmem [#allocation8], %s240
          %s242 = smul.u32 2, %s26
          %s244 = ssub.s32 256, 256
          %245 = vsyncadd %s238, %s244
          %s246 = smul.addr %s242, 128
          %s247 = scalar_lea.hbm %s2, %s246
          %s248 = sshll.u32 %s241, 4
          %s249 = int_to_ptr.vmem [resolvable:$true] %s248
          %254 = dma.hbm_to_vmem [thread:$0]  %s247, 256, %s249, %s238, 128, 128, 8
        $region28: #{tpu_custom_call.1} parent=15 // pred_fallthru
          _
      $region16: #{tpu_custom_call.1} parent=5 // pred_fallthru
        _
      %p255 = scmp.le.s32.totalorder 1, %s18
      %p256 = scmp.lt.s32.totalorder %s18, 5
      %p257 = pnand %p255, %p256
      %p258 = pneg %p257
      // Predicated region
      $region29: #{tpu_custom_call.1} parent=5 // pred_check
        _
      $region30: #{tpu_custom_call.1} parent=5 // pred_check_branch
        %260 = sbr.rel (%p257) target = $region32
      $region31: #{tpu_custom_call.1} parent=5 // pred_region
        %s261 = ssub.s32 %s18, 1
        %s262 = sand.u32 %s43, 1
        %s263 = scalar_lea.sflag [#allocation4], %s262
        %s264 = sand.u32 %s43, 1
        %s265 = smul.addr %s264, 16
        %s266 = scalar_lea.vmem [#allocation3], %s265
        // Predicated region
        $region33: #{tpu_custom_call.1} parent=31 // pred_check
          %p267 = pneg %p56
        $region34: #{tpu_custom_call.1} parent=31 // pred_check_branch
          %269 = sbr.rel (%p267) target = $region36
        $region35: #{tpu_custom_call.1} parent=31 // pred_region
          %270 = dma.done %s263, 256
        $region36: #{tpu_custom_call.1} parent=31 // pred_fallthru
          _
        %s271 = sand.u32 %s23, 1
        %s272 = scalar_lea.sflag [#allocation7], %s271
        %s273 = sand.u32 %s95, 1
        %s274 = smul.addr %s273, 16
        %s275 = scalar_lea.vmem [#allocation6], %s274
        // Predicated region
        $region37: #{tpu_custom_call.1} parent=31 // pred_check
          %p276 = pneg %p108
        $region38: #{tpu_custom_call.1} parent=31 // pred_check_branch
          %278 = sbr.rel (%p276) target = $region40
        $region39: #{tpu_custom_call.1} parent=31 // pred_region
          %279 = dma.done %s272, 256
        $region40: #{tpu_custom_call.1} parent=31 // pred_fallthru
          _
        %s280 = sand.u32 %s23, 1
        %s281 = scalar_lea.sflag [#allocation7], %s280
        %s282 = sand.u32 %s121, 1
        %s283 = smul.addr %s282, 16
        %s284 = scalar_lea.vmem [#allocation8], %s283
        // Predicated region
        $region41: #{tpu_custom_call.1} parent=31 // pred_check
          %p285 = pneg %p134
        $region42: #{tpu_custom_call.1} parent=31 // pred_check_branch
          %287 = sbr.rel (%p285) target = $region44
        $region43: #{tpu_custom_call.1} parent=31 // pred_region
          %288 = dma.done %s281, 256
        $region44: #{tpu_custom_call.1} parent=31 // pred_fallthru
          _
        %s289 = sand.u32 %s43, 1
        %s290 = scalar_lea.sflag [#allocation4], %s289
        %s291 = sand.u32 %s43, 1
        %s292 = smul.addr %s291, 16
        %s293 = scalar_lea.vmem [#allocation3], %s292
        %p294 = pneg %p56
        %p295 = pneg %p53
        %s296 = sand.u32 %s23, 1
        %s297 = scalar_lea.sflag [#allocation7], %s296
        %s298 = sand.u32 %s95, 1
        %s299 = smul.addr %s298, 16
        %s300 = scalar_lea.vmem [#allocation6], %s299
        %p301 = pneg %p108
        %p302 = pneg %p105
        %s303 = sand.u32 %s23, 1
        %s304 = scalar_lea.sflag [#allocation7], %s303
        %s305 = sand.u32 %s121, 1
        %s306 = smul.addr %s305, 16
        %s307 = scalar_lea.vmem [#allocation8], %s306
        %p308 = pneg %p134
        %p309 = pneg %p131
        %p310 = pneg %p160
        %p311 = pneg %p157
        %s312 = sand.u32 %s147, 1
        %s313 = scalar_lea.sflag [#allocation5], %s312
        %s314 = sand.u32 %s147, 1
        %s315 = smul.addr %s314, 8
        %s316 = scalar_lea.vmem [#allocation9], %s315
        %s317 = smul.u32 2, %s27
        %s318 = sadd.s32 %s27, 1
        %p319 = scmp.lt.s32.totalorder %s318, 0
        %s320 = ssub.s32 0, %s318
        %s321 = scalar_select %p319, %s320, %s318
        %s322 = sand.u32 %s321, 1
        %s323 = ssub.s32 0, %s322
        %s324 = scalar_select %p319, %s323, %s322
        %p325 = scmp.ne.s32.totalorder %s324, 0
        %p326 = scmp.lt.s32.totalorder %s324, 0
        %p327 = pnand %p326, %p325
        %p328 = pneg %p327
        %s329 = sadd.s32 %s324, 2
        %s330 = scalar_select %p328, %s329, %s324
        %s331 = smul.u32 2, %s330
        %s332 = smul.u32 2, %s28
        %p333 = scmp.eq.s32.totalorder %s28, 0
        // Predicated region
        $region45: #{tpu_custom_call.1} parent=31 // pred_check
          %p334 = pneg %p333
        $region46: #{tpu_custom_call.1} parent=31 // pred_check_branch
          %336 = sbr.rel (%p334) target = $region48
        $region47: #{tpu_custom_call.1} parent=31 // pred_region
          %vm337 = vcmask 7168
          %338 = vst.msk [vmem:[#allocation2] sm:$0xff] %vm337, 0.0
          %339 = vst.msk [vmem:[#allocation2 + $0x8] sm:$0xff] %vm337, 0.0
        $region48: #{tpu_custom_call.1} parent=31 // pred_fallthru
          _
        %v340 = vld [vmem:[%s266] sm:$0xff]
        %v341 = vld [vmem:[%s266 + $0x8] sm:$0xff]
        %v342 = vld [vmem:[%s284] sm:$0xff]
        %v343 = vld [vmem:[%s284 + $0x8] sm:$0xff]
        %344 = vmatprep.subr.mxu0 0.0
        %345 = vmatpush1.xpose.msra.mxu0 0.0
        %346 = vmatprep.subr.mxu0 0.0
        %347 = vmatpush1.xpose.msra.mxu0 0.0
        %348 = vmatprep.subr.mxu0 0.0
        %349 = vmatpush1.xpose.msra.mxu0 0.0
        %350 = vmatprep.subr.mxu0 0.0
        %351 = vmatpush1.xpose.msra.mxu0 0.0
        %352 = vmatprep.subr.mxu0 0.0
        %353 = vmatpush1.xpose.msra.mxu0 0.0
        %354 = vmatprep.subr.mxu0 0.0
        %355 = vmatpush1.xpose.msra.mxu0 0.0
        %356 = vmatprep.subr.mxu0 0.0
        %357 = vmatpush1.xpose.msra.mxu0 0.0
        %358 = vmatprep.subr.mxu0 0.0
        %359 = vmatpush1.xpose.msra.mxu0 0.0
        %360 = vmatprep.subr.mxu0 0.0
        %361 = vmatpush1.xpose.msra.mxu0 0.0
        %362 = vmatprep.subr.mxu0 0.0
        %363 = vmatpush1.xpose.msra.mxu0 0.0
        %364 = vmatprep.subr.mxu0 0.0
        %365 = vmatpush1.xpose.msra.mxu0 0.0
        %366 = vmatprep.subr.mxu0 0.0
        %367 = vmatpush1.xpose.msra.mxu0 0.0
        %368 = vmatprep.subr.mxu0 0.0
        %369 = vmatpush1.xpose.msra.mxu0 0.0
        %370 = vmatprep.subr.mxu0 0.0
        %371 = vmatpush1.xpose.msra.mxu0 0.0
        %372 = vmatprep.subr.mxu0 0.0
        %373 = vmatpush1.xpose.msra.mxu0 %v343
        %374 = vmatprep.subr.mxu0 0.0
        %375 = vmatpush1.xpose.msra.mxu0 %v342
        %376 = vmatprep.subr.mxu0 0.0
        %377 = vmatpush2.xpose.msra.mxu0 0.0
        %378 = vmatprep.subr.mxu0 0.0
        %379 = vmatpush2.xpose.msra.mxu0 0.0
        %380 = vmatprep.subr.mxu0 0.0
        %381 = vmatpush2.xpose.msra.mxu0 0.0
        %382 = vmatprep.subr.mxu0 0.0
        %383 = vmatpush2.xpose.msra.mxu0 0.0
        %384 = vmatprep.subr.mxu0 0.0
        %385 = vmatpush2.xpose.msra.mxu0 0.0
        %386 = vmatprep.subr.mxu0 0.0
        %387 = vmatpush2.xpose.msra.mxu0 0.0
        %388 = vmatprep.subr.mxu0 0.0
        %389 = vmatpush2.xpose.msra.mxu0 0.0
        %390 = vmatprep.subr.mxu0 0.0
        %391 = vmatpush2.xpose.msra.mxu0 0.0
        %392 = vmatprep.subr.mxu0 0.0
        %393 = vmatpush2.xpose.msra.mxu0 0.0
        %394 = vmatprep.subr.mxu0 0.0
        %395 = vmatpush2.xpose.msra.mxu0 0.0
        %396 = vmatprep.subr.mxu0 0.0
        %397 = vmatpush2.xpose.msra.mxu0 0.0
        %398 = vmatprep.subr.mxu0 0.0
        %399 = vmatpush2.xpose.msra.mxu0 0.0
        %400 = vmatprep.subr.mxu0 0.0
        %401 = vmatpush2.xpose.msra.mxu0 0.0
        %402 = vmatprep.subr.mxu0 0.0
        %403 = vmatpush2.xpose.msra.mxu0 0.0
        %404 = vmatprep.subr.mxu0 0.0
        %405 = vmatpush2.xpose.msra.mxu0 0.0
        %406 = vmatprep.subr.mxu0 0.0
        %407 = vmatpush2.xpose.msra.mxu0 0.0
        %408 = vmatprep.mubr.f32.mxu0 0.0
        %409 = vmatmul.mubr.f32.gmra.mxu0 %v340
        %v410 = vpop.f32.mrf.mxu0
        %v411 = vadd.f32 0.0, %v410
        %v412 = vpop.f32.mrf.mxu0
        %413 = vmatprep.mubr.f32.mxu0 0.0
        %414 = vmatmul.mubr.f32.gmra.mxu0 %v341
        %v415 = vpop.f32.mrf.mxu0
        %v416 = vadd.f32 0.0, %v415
        %v417 = vpop.f32.mrf.mxu0
        %418 = vdwg.mxu0
        %v419 = vsub.f32 %v411, 10.0
        %v420 = vsub.f32 %v416, 10.0
        %v421 = vmul.f32 %v419, 1.442695
        %v422 = vpow.pop %v421
        %v423 = vmul.f32 %v420, 1.442695
        %v424 = vpow.pop %v423
        %v425 = vld [vmem:[#allocation2] sm:$0xff]
        %v426 = vld [vmem:[#allocation2 + $0x8] sm:$0xff]
        %vm427 = vcmask 130048
        %v428 = vsel %vm427, %v422, 0.0
        %429 = vadd.xlane.f32.xlu0 %v428
        %v430 = vpop.xlane.xlu0 %429
        %v431 = vsel %vm427, %v424, 0.0
        %432 = vadd.xlane.f32.xlu0 %v431
        %v433 = vpop.xlane.xlu0 %432
        %v434 = vadd.f32 %v425, %v430
        %v435 = vadd.f32 %v426, %v433
        %vm436 = vcmask 7168
        %437 = vst.msk [vmem:[#allocation2] sm:$0xff] %vm436, %v434
        %438 = vst.msk [vmem:[#allocation2 + $0x8] sm:$0xff] %vm436, %v435
        %p439 = scmp.eq.s32.totalorder %s27, %s28
        // Predicated region
        $region49: #{tpu_custom_call.1} parent=31 // pred_check
          %p440 = pneg %p439
        $region50: #{tpu_custom_call.1} parent=31 // pred_check_branch
          %442 = sbr.rel (%p440) target = $region52
        $region51: #{tpu_custom_call.1} parent=31 // pred_region
          %v443 = vlaneseq
          %v444 = vshrl.u32 %v443, 7
          %v445 = vadd.s32 %v444, 8
          %v446 = vlaneseq
          %v447 = vand.u32 %v446, 127
          %v448 = vld [vmem:[#allocation2] sm:$0xff]
          %v449 = vld [vmem:[#allocation2 + $0x8] sm:$0xff]
          %vm450 = vcmp.eq.s32.totalorder %v444, %v447
          %vm451 = vcmp.eq.s32.totalorder %v445, %v447
          %v452 = vsel %vm450, %v422, 0.0
          %v453 = vsel %vm451, %v424, 0.0
          %v454 = vsel %vm427, %v452, 0.0
          %455 = vadd.xlane.f32.xlu0 %v454
          %v456 = vpop.xlane.xlu0 %455
          %v457 = vsel %vm427, %v453, 0.0
          %458 = vadd.xlane.f32.xlu0 %v457
          %v459 = vpop.xlane.xlu0 %458
          %v460 = vsub.f32 %v448, %v456
          %v461 = vsub.f32 %v449, %v459
          %462 = vst.msk [vmem:[#allocation2] sm:$0xff] %vm436, %v460
          %463 = vst.msk [vmem:[#allocation2 + $0x8] sm:$0xff] %vm436, %v461
        $region52: #{tpu_custom_call.1} parent=31 // pred_fallthru
          _
        %p464 = scmp.eq.s32.totalorder %s28, 1
        // Predicated region
        $region53: #{tpu_custom_call.1} parent=31 // pred_check
          %p465 = pneg %p464
        $region54: #{tpu_custom_call.1} parent=31 // pred_check_branch
          %467 = sbr.rel (%p465) target = $region56
        $region55: #{tpu_custom_call.1} parent=31 // pred_region
          %v468 = vld [vmem:[#allocation2] sm:$0xff]
          %v469 = vld [vmem:[#allocation2 + $0x8] sm:$0xff]
          %v470 = vsub.f32 %v468, 0.0010895983
          %v471 = vsub.f32 %v469, 0.0010895983
          %v472 = vmax.f32 %v470, 1e-37
          %v473 = vmax.f32 %v471, 1e-37
          %v474 = vlog2.pop %v472
          %v475 = vmul.f32 %v474, 0.6931472
          %v476 = vlog2.pop %v473
          %v477 = vmul.f32 %v476, 0.6931472
          %v478 = vadd.f32 %v475, 10.0
          %v479 = vadd.f32 %v477, 10.0
          %v480 = vld [vmem:[%s266] sm:$0xff]
          %v481 = vld [vmem:[%s266 + $0x8] sm:$0xff]
          %v482 = vld [vmem:[%s275] sm:$0xff]
          %v483 = vld [vmem:[%s275 + $0x8] sm:$0xff]
          %v484 = vmul.f32 %v480, %v482
          %v485 = vmul.f32 %v481, %v483
          %486 = vadd.xlane.f32.xlu0 %v484
          %v487 = vpop.xlane.xlu0 %486
          %488 = vadd.xlane.f32.xlu0 %v485
          %v489 = vpop.xlane.xlu0 %488
          %v490 = vsub.f32 %v478, %v487
          %v491 = vsub.f32 %v479, %v489
          %v492 = vlaneseq
          %v493 = vshrl.u32 %v492, 7
          %v494 = vadd.s32 %v493, 8
          %s495 = smul.u32 %s27, 16
          %v496 = vstv %s495
          %v497 = vadd.s32 %v493, %v496
          %v498 = vadd.s32 %v494, %v496
          %vm499 = vcmp.lt.s32.totalorder %v497, 0
          %v500 = vsub.s32 0, %v497
          %v501 = vsel %vm499, %v500, %v497
          %v502 = vshrl.u32 %v501, 4
          %v503 = vand.u32 %v501, 15
          %v504 = vsub.s32 0, %v503
          %v505 = vsel %vm499, %v504, %v503
          %vm506 = vcmp.lt.s32.totalorder %v498, 0
          %v507 = vsub.s32 0, %v498
          %v508 = vsel %vm506, %v507, %v498
          %v509 = vshrl.u32 %v508, 4
          %v510 = vand.u32 %v508, 15
          %v511 = vsub.s32 0, %v510
          %v512 = vsel %vm506, %v511, %v510
          %vm513 = vcmp.ne.s32.totalorder %v505, 0
          %vm514 = vcmp.ne.s32.totalorder %v512, 0
          %vm515 = vcmp.lt.s32.totalorder %v505, 0
          %vm516 = vcmp.lt.s32.totalorder %v512, 0
          %vm517 = vmand %vm515, %vm513
          %vm518 = vmand %vm516, %vm514
          %v519 = vadd.s32 %v505, 16
          %v520 = vadd.s32 %v512, 16
          %v521 = vsel %vm517, %v519, %v505
          %v522 = vsel %vm518, %v520, %v512
          %vm523 = vcmp.lt.s32.totalorder %v521, 4
          %vm524 = vcmp.lt.s32.totalorder %v522, 4
          %v525 = vsel %vm523, %v490, 0.0
          %v526 = vsel %vm524, %v491, 0.0
          %v527 = vsel %vm436, %v525, 0.0
          %v528 = vsel %vm436, %v526, 0.0
          %v529 = vadd.f32 %v527, %v528
          %530 = vadd.xlane.f32.xlu0 %v529
          %v531 = vpop.xlane.xlu0 %530
          %v532 = vrot.slane %v531, 4
          %v533 = vadd.f32 %v531, %v532
          %v534 = vrot.slane %v533, 2
          %v535 = vadd.f32 %v533, %v534
          %v536 = vrot.slane %v535, 1
          %v537 = vadd.f32 %v535, %v536
          %s538 = vtos %v537
          %v539 = vstv %s538
          %540 = vst [vmem:[%s316] sm:$0xff] %v539
        $region56: #{tpu_custom_call.1} parent=31 // pred_fallthru
          _
        %s541 = sand.u32 %s147, 1
        %s542 = scalar_lea.sflag [#allocation5], %s541
        %s543 = sand.u32 %s147, 1
        %s544 = smul.addr %s543, 8
        %s545 = scalar_lea.vmem [#allocation9], %s544
        // Predicated region
        $region57: #{tpu_custom_call.1} parent=31 // pred_check
          %p546 = pneg %p157
        $region58: #{tpu_custom_call.1} parent=31 // pred_check_branch
          %548 = sbr.rel (%p546) target = $region60
        $region59: #{tpu_custom_call.1} parent=31 // pred_region
          %s550 = ssub.s32 128, 128
          %551 = vsyncadd %s542, %s550
          %s552 = smul.addr %s27, 128
          %s553 = scalar_lea.hbm %s3, %s552
          %s555 = sshll.u32 %s545, 4
          %s556 = int_to_ptr.vmem [resolvable:$true] %s555
          %558 = dma.vmem_to_hbm [thread:$0]  %s556, 128, %s553, %s542
        $region60: #{tpu_custom_call.1} parent=31 // pred_fallthru
          _
      $region32: #{tpu_custom_call.1} parent=5 // pred_fallthru
        _
      %p559 = scmp.le.s32.totalorder 2, %s18
      // Predicated region
      $region61: #{tpu_custom_call.1} parent=5 // pred_check
        %p560 = pneg %p559
      $region62: #{tpu_custom_call.1} parent=5 // pred_check_branch
        %562 = sbr.rel (%p560) target = $region64
      $region63: #{tpu_custom_call.1} parent=5 // pred_region
        %s563 = ssub.s32 %s18, 2
        // Predicated region
        $region65: #{tpu_custom_call.1} parent=63 // pred_check
          %p564 = pneg %p163
        $region66: #{tpu_custom_call.1} parent=63 // pred_check_branch
          %566 = sbr.rel (%p564) target = $region68
        $region67: #{tpu_custom_call.1} parent=63 // pred_region
          %s567 = sand.u32 %s148, 1
          %s568 = scalar_lea.sflag [#allocation5], %s567
          %s569 = sand.u32 %s148, 1
          %s570 = smul.addr %s569, 8
          %s571 = scalar_lea.vmem [#allocation9], %s570
          %572 = dma.done %s568, 128
        $region68: #{tpu_custom_call.1} parent=63 // pred_fallthru
          _
      $region64: #{tpu_custom_call.1} parent=5 // pred_fallthru
        _
    $region6: #{tpu_custom_call.1} parent=1 // loop_footer
      %s22 = sadd.s32 1, %s18
    $region7: #{tpu_custom_call.1} parent=1 // loop_footer_branch
      %17 = sbr.rel target = $region3
    $region8: #{tpu_custom_call.1} parent=1 // loop_exit
      _
    %573 = vsyncpa [#allocation4], 1
    %s574 = scalar_lea.sflag [#allocation4], 1
    %575 = vsyncpa %s574, 1
    %576 = vsyncpa [#allocation7], 1
    %s577 = scalar_lea.sflag [#allocation7], 1
    %578 = vsyncpa %s577, 1
    %579 = vsyncpa [#allocation5], 1
    %s580 = scalar_lea.sflag [#allocation5], 1
    %581 = vsyncpa %s580, 1

</llo_original>
